<compile_context>
chip_gen: v5e
topology: v5e:2x2
jax: 0.10.0
libtpu: 0.0.40
codegen_flags: <defaults>
</compile_context>

<pallas_src>
import jax
import jax.numpy as jnp
from jax.experimental import pallas as pl
from jax.experimental.pallas import tpu as pltpu


def _hbm_copy_kernel(x_ref, o_ref, sem):
    # Single direct HBM->HBM DMA: no VMEM staging, no grid steps.
    cp = pltpu.make_async_copy(x_ref, o_ref, sem)
    cp.start()
    cp.wait()


def _pallas_identity_copy(x: jax.Array) -> jax.Array:
    """Materialize a copy of `x` with one HBM->HBM DMA (no VMEM round trip)."""
    bytes_accessed = 2 * x.size * x.dtype.itemsize  # read + write
    return pl.pallas_call(
        _hbm_copy_kernel,
        out_shape=jax.ShapeDtypeStruct(x.shape, x.dtype),
        in_specs=[pl.BlockSpec(memory_space=pl.ANY)],
        out_specs=pl.BlockSpec(memory_space=pl.ANY),
        scratch_shapes=[pltpu.SemaphoreType.DMA(())],
        cost_estimate=pl.CostEstimate(
            flops=0, transcendentals=0, bytes_accessed=bytes_accessed
        ),
    )(x)


def wdcd_forward(x: jax.Array, *, copy: bool = False) -> jax.Array:
    """Pallas realization of wdcd.forward (empty module -> pass-through).

    Default (copy=False): true no-op, returns `x` -- zero HBM traffic, no
    kernel launch (fastest possible realization of an empty forward).

    copy=True: returns a materialized copy produced by a single HBM->HBM DMA
    Pallas kernel (useful if a distinct output buffer is required).
    """
    if not copy:
        return x
    return _pallas_identity_copy(x)


if __name__ == "__main__":
    key = jax.random.PRNGKey(0)
    # NCHW input, small shapes: batch=2, channels=4, spatial=16x16
    x = jax.random.normal(key, (2, 4, 16, 16), dtype=jnp.float32)

    # Default (recommended) path: pure pass-through, no kernel launched.
    y0 = wdcd_forward(x)
    jax.block_until_ready(y0)
    assert y0.shape == x.shape and y0.dtype == x.dtype

    # Explicit-copy path: exercises the Pallas HBM->HBM DMA kernel once.
    y1 = wdcd_forward(x, copy=True)
    jax.block_until_ready(y1)
    assert y1.shape == x.shape and y1.dtype == x.dtype
    assert bool(jnp.allclose(y0, x))
    assert bool(jnp.allclose(y1, x))

    print("KERNEL_OK")
</pallas_src>

<mosaic_0001>
module attributes {stable_mosaic.version = 11 : i64} {
  func.func @_hbm_copy_kernel(%arg0: memref<2x4x16x16xf32, #tpu.memory_space<any>>, %arg1: memref<2x4x16x16xf32, #tpu.memory_space<any>>, %arg2: memref<!tpu.dma_semaphore, #tpu.memory_space<semaphore_mem>>) attributes {dimension_semantics = [], scalar_prefetch = 0 : i64, scratch_operands = 1 : i64, tpu.core_type = #tpu.core_type<tc>} {
    tpu.enqueue_dma source(%arg0 : memref<2x4x16x16xf32, #tpu.memory_space<any>>) target(%arg1 : memref<2x4x16x16xf32, #tpu.memory_space<any>>) target_semaphore(%arg2 : memref<!tpu.dma_semaphore, #tpu.memory_space<semaphore_mem>>)
    tpu.wait_dma2 semaphore(%arg2 : memref<!tpu.dma_semaphore, #tpu.memory_space<semaphore_mem>>) src(%arg0 : memref<2x4x16x16xf32, #tpu.memory_space<any>>) dst(%arg1 : memref<2x4x16x16xf32, #tpu.memory_space<any>>)
    return
  }
}

</mosaic_0001>

<llo_original>
// kernel: tpu_custom_call.1
$region0: #{tpu_custom_call.1}
  #allocation0 [shape = 'u32[]', space=smem, size = 0x4, offset = 0x4, fixed_abs, tag = 'smem constant byte address 0x4 - core index']
  #allocation1 [shape = 'u32[72,128]{1,0:T(1,128)}', space=vmem, size = 0x9000, scoped, tag = 'internal scratch']
  #allocation2 [shape = 's32[1]{0}', space=sflag, size = 0x4, scoped, tag = 'scratch operand']
  #allocation3 [shape = 's32[]', space=sflag, size = 0x4, offset = 0, fixed_abs, tag = 'sflag constant byte address 0x0 - dummy sync flag']
  #allocation4 [shape = 'u32[0]{0}', space=smem, size = 0, offset = 0, fixed_abs, tag = 'smem constant byte address 0x0 - null']
  %s0 = inlined_call_operand.hbm [shape: f32[2,4,16,16], index: 0, kind: input, shape index: {}]
  %s1 = inlined_call_operand.hbm [shape: f32[2,4,16,16], index: 1, kind: output, shape index: {}]
  %s2 = sld [smem:[#allocation0]]
  $region2: #{tpu_custom_call.1} parent=0
    _
  %s4 = ssub.s32 1, %s2
  %s5 = scalar_select 0, %s4, %s2
  %s7 = sshll.u32 1, 14
  %s8 = sxor.u32 4294967295, %s7
  %s10 = sshll.u32 %s0, 4
  %s11 = int_to_ptr.hbm [resolvable:$true] %s10
  %s12 = sshll.u32 %s1, 4
  %s13 = int_to_ptr.hbm [resolvable:$true] %s12
  %16 = dma.general %s11, 2048, %s13, [#allocation2], [#allocation3], [#allocation4], 0, 0
  %s17 = smul.u32 2, 4
  %s18 = smul.u32 %s17, 16
  %s19 = smul.u32 %s18, 1
  %s20 = sshll.u32 %s19, 4
  %21 = dma.done [#allocation2], %s20
  %22 = vsyncmov [#allocation2]
  %s23 = vpop.sfrf %22
  %p24 = scmp.eq.s32.totalorder %s23, 0
  %p25 = pneg %p24
  %27 = shalt.err (%p25)

</llo_original>
